<compile_context>
chip_gen: v6e
topology: v6e:2x2x1
jax: 0.10.0
libtpu: 0.0.40
codegen_flags: <defaults>
</compile_context>

<pallas_src>
import functools

import jax
import jax.numpy as jnp
from jax.experimental import pallas as pl
from jax.experimental.pallas import tpu as pltpu

LOG_STD_MIN = -20.0
LOG_STD_MAX = 2.0


def _policy_kernel(x_ref, w1_ref, b1_ref, w2_ref, b2_ref, w3_ref, b3_ref,
                   y_ref, *, action_dim):
    # x_ref: [TB, state_dim] in the caller's native layout (cast on-chip).
    # Weights: [out, in] (PyTorch layout). Biases: [out, 1] (f32).
    # Activations are kept as [features, TB]: batch on the 128-lane axis so
    # every intermediate and the final store are lane-dense.
    x = x_ref[...].astype(w1_ref.dtype)

    # Layer 1: h1[o, b] = sum_k W1[o, k] * x[b, k].  Contracting the minor
    # dims of both operands (NT matmul) folds the transpose into the MXU —
    # no wrapper-side transpose pass over x.
    h = jax.lax.dot_general(
        w1_ref[...], x, (((1,), (1,)), ((), ())),
        preferred_element_type=jnp.float32)
    h = jnp.maximum(h + b1_ref[...], 0.0)

    # Layer 2: relu(W2 @ h + b2).  Downcast only right before the dot; all
    # elementwise work (bias add / ReLU / clamp) stays in f32.
    h = jnp.dot(w2_ref[...], h.astype(w2_ref.dtype),
                preferred_element_type=jnp.float32)
    h = jnp.maximum(h + b2_ref[...], 0.0)

    # Output layer (Identity activation): y = W3 @ h + b3, shape [2*A, TB].
    y = jnp.dot(w3_ref[...], h.astype(w3_ref.dtype),
                preferred_element_type=jnp.float32)
    y = y + b3_ref[...]

    # Clamp only the log_std half (rows >= action_dim) via a sublane mask and
    # store the whole lane-dense slab in one unmasked store.
    row = jax.lax.broadcasted_iota(jnp.int32, y.shape, 0)
    y = jnp.where(row >= action_dim,
                  jnp.clip(y, LOG_STD_MIN, LOG_STD_MAX), y)
    y_ref[...] = y.astype(y_ref.dtype)


def _choose_batch_tile(batch, block_batch):
    """Pick a lane-aligned batch tile and grid length.

    - tiny batches (< 128): one full-array block (no raggedness at all).
    - otherwise: tile of up to `block_batch` lanes (clamped to 16384 so the
      per-step VMEM stays well inside every generation's scoped default),
      never larger than the lane-aligned floor of `batch`, and split into at
      least 2 tiles for large batches so v7x's second TensorCore has work.
    """
    lane = 128
    if batch <= lane:
        return batch, 1
    block_batch = max(lane, min(int(block_batch), 16384))
    block_batch = (block_batch // lane) * lane
    floor_lane = (batch // lane) * lane
    tb = min(block_batch, floor_lane)
    min_big = 4096
    if batch >= 2 * min_big and pl.cdiv(batch, tb) < 2:
        tb = min(tb, pl.cdiv(pl.cdiv(batch, 2), lane) * lane)
    num_tiles = pl.cdiv(batch, tb)
    return tb, num_tiles


def policy_network_forward(state, params, action_dim, *,
                           block_batch=8192, use_bf16=True):
    """PolicyNetwork.forward as a Pallas kernel.

    state:  [batch, state_dim] float32 (native PyTorch layout, fed directly).
    params: weights in PyTorch layout w{i}: [out, in], biases b{i}: [out, 1].
    Returns (mean [batch, action_dim], log_std [batch, action_dim]) in f32.
    """
    batch, state_dim = state.shape
    w1, b1 = params["w1"], params["b1"]
    w2, b2 = params["w2"], params["b2"]
    w3, b3 = params["w3"], params["b3"]
    h1, h2, out_dim = w1.shape[0], w2.shape[0], w3.shape[0]
    assert out_dim == 2 * action_dim

    compute_dtype = jnp.bfloat16 if use_bf16 else jnp.float32
    # bf16 output slab halves the write bytes; precision is already limited by
    # the bf16 matmul operands.  Exact path keeps f32 end-to-end.
    out_dtype = jnp.bfloat16 if use_bf16 else jnp.float32

    tb, num_tiles = _choose_batch_tile(batch, block_batch)
    out_cols = num_tiles * tb  # output slab lanes divide the tile exactly

    w1c = w1.astype(compute_dtype)
    w2c = w2.astype(compute_dtype)
    w3c = w3.astype(compute_dtype)

    flops = 2 * out_cols * (state_dim * h1 + h1 * h2 + h2 * out_dim)
    bytes_accessed = int(
        state.size * state.dtype.itemsize
        + sum(a.size * a.dtype.itemsize for a in (w1c, b1, w2c, b2, w3c, b3))
        + out_cols * out_dim * jnp.dtype(out_dtype).itemsize)

    kernel = functools.partial(_policy_kernel, action_dim=action_dim)
    y = pl.pallas_call(
        kernel,
        out_shape=jax.ShapeDtypeStruct((out_dim, out_cols), out_dtype),
        grid=(num_tiles,),
        in_specs=[
            # state tile in native [batch, state_dim] layout: a contiguous
            # leading-dim DMA straight from the caller's array. A ragged last
            # tile leaves garbage padding columns, which stay column-local and
            # are never read by the wrapper slices.
            pl.BlockSpec((tb, state_dim), lambda i: (i, 0)),
            # weights / biases: resident in VMEM across all batch tiles.
            pl.BlockSpec((h1, state_dim), lambda i: (0, 0)),
            pl.BlockSpec((h1, 1), lambda i: (0, 0)),
            pl.BlockSpec((h2, h1), lambda i: (0, 0)),
            pl.BlockSpec((h2, 1), lambda i: (0, 0)),
            pl.BlockSpec((out_dim, h2), lambda i: (0, 0)),
            pl.BlockSpec((out_dim, 1), lambda i: (0, 0)),
        ],
        out_specs=pl.BlockSpec((out_dim, tb), lambda i: (0, i)),
        compiler_params=pltpu.CompilerParams(
            dimension_semantics=("parallel",)),
        cost_estimate=pl.CostEstimate(
            flops=flops, transcendentals=0, bytes_accessed=bytes_accessed),
    )(state, w1c, b1, w2c, b2, w3c, b3)

    # torch.chunk(y, 2, dim=-1): tiny slices / transposes of the feature-major
    # slab (downstream code that can consume [action_dim, batch] should take
    # y directly and skip these).
    mean = y[:action_dim, :batch].T.astype(jnp.float32)
    log_std = y[action_dim:, :batch].T.astype(jnp.float32)
    return mean, log_std


def init_params(key, state_dim, hidden_layers, action_dim):
    """Deterministic init mimicking nn.Linear's U(-1/sqrt(in), 1/sqrt(in)).

    Weights kept in PyTorch layout [out, in]; biases stored as [out, 1].
    """
    dims = [state_dim] + list(hidden_layers) + [action_dim * 2]
    params = {}
    for i in range(len(dims) - 1):
        fan_in, fan_out = dims[i], dims[i + 1]
        key, kw, kb = jax.random.split(key, 3)
        bound = 1.0 / (fan_in ** 0.5)
        params[f"w{i + 1}"] = jax.random.uniform(
            kw, (fan_out, fan_in), jnp.float32, -bound, bound)
        params[f"b{i + 1}"] = jax.random.uniform(
            kb, (fan_out, 1), jnp.float32, -bound, bound)
    return params


def reference_forward(state, params, action_dim):
    """Pure-JAX f32 reference (canonical [batch, features] math)."""
    h = jnp.maximum(state @ params["w1"].T + params["b1"].T, 0.0)
    h = jnp.maximum(h @ params["w2"].T + params["b2"].T, 0.0)
    y = h @ params["w3"].T + params["b3"].T
    mean, log_std = y[:, :action_dim], y[:, action_dim:]
    return mean, jnp.clip(log_std, LOG_STD_MIN, LOG_STD_MAX)


if __name__ == "__main__":
    # Small shapes consistent with the module: state_dim=16, action_dim=4,
    # hidden_layers=[32, 32].
    state_dim = 16
    action_dim = 4
    hidden_layers = [32, 32]

    key = jax.random.PRNGKey(0)
    params = init_params(key, state_dim, hidden_layers, action_dim)

    # --- tiny batch (single full block, no raggedness) ---
    batch = 2
    key, k_state = jax.random.split(key)
    state = jax.random.normal(k_state, (batch, state_dim), jnp.float32)
    ref_mean, ref_log_std = reference_forward(state, params, action_dim)

    # Default path: bf16 MXU operands + bf16 output slab, f32 elementwise.
    mean, log_std = policy_network_forward(state, params, action_dim)
    mean = jax.block_until_ready(mean)
    log_std = jax.block_until_ready(log_std)
    assert mean.shape == (batch, action_dim)
    assert log_std.shape == (batch, action_dim)
    assert jnp.allclose(mean, ref_mean, atol=3e-2, rtol=3e-2)
    assert jnp.allclose(log_std, ref_log_std, atol=3e-2, rtol=3e-2)

    # Exact-semantics check with f32 operands / f32 output.
    mean32, log_std32 = policy_network_forward(
        state, params, action_dim, use_bf16=False)
    mean32 = jax.block_until_ready(mean32)
    log_std32 = jax.block_until_ready(log_std32)
    assert jnp.allclose(mean32, ref_mean, atol=1e-4, rtol=1e-4)
    assert jnp.allclose(log_std32, ref_log_std, atol=1e-4, rtol=1e-4)

    # --- moderate batch: exercises multi-tile grid + ragged last tile ---
    batch_big = 300
    key, k_state2 = jax.random.split(key)
    state_big = jax.random.normal(k_state2, (batch_big, state_dim), jnp.float32)
    ref_mean_b, ref_log_std_b = reference_forward(state_big, params, action_dim)
    mean_b, log_std_b = policy_network_forward(state_big, params, action_dim)
    mean_b = jax.block_until_ready(mean_b)
    log_std_b = jax.block_until_ready(log_std_b)
    assert mean_b.shape == (batch_big, action_dim)
    assert jnp.allclose(mean_b, ref_mean_b, atol=3e-2, rtol=3e-2)
    assert jnp.allclose(log_std_b, ref_log_std_b, atol=3e-2, rtol=3e-2)

    # TODO(synk): sample()/get_action() use torch.distributions.Normal.rsample
    # (reparameterized sampling + tanh/log_prob correction); only the
    # deterministic forward() hot path is implemented as a kernel.
    print("KERNEL_OK")
</pallas_src>

<mosaic_0001>
module attributes {stable_mosaic.version = 11 : i64} {
  func.func @_policy_kernel(%arg0: i32, %arg1: memref<2x16xf32, #tpu.memory_space<vmem>>, %arg2: memref<32x16xbf16, #tpu.memory_space<vmem>>, %arg3: memref<32x1xf32, #tpu.memory_space<vmem>>, %arg4: memref<32x32xbf16, #tpu.memory_space<vmem>>, %arg5: memref<32x1xf32, #tpu.memory_space<vmem>>, %arg6: memref<8x32xbf16, #tpu.memory_space<vmem>>, %arg7: memref<8x1xf32, #tpu.memory_space<vmem>>, %arg8: memref<8x2xbf16, #tpu.memory_space<vmem>>) attributes {dimension_semantics = [#tpu.dimension_semantics<parallel>], iteration_bounds = array<i64: 1>, scalar_prefetch = 0 : i64, scratch_operands = 0 : i64, tpu.core_type = #tpu.core_type<tc>, window_params = [{transform_indices = @transform_0, window_bounds = array<i64: 2, 16>}, {pipeline_mode = #tpu.pipeline_mode<synchronous>, transform_indices = @transform_1, window_bounds = array<i64: 32, 16>}, {pipeline_mode = #tpu.pipeline_mode<synchronous>, transform_indices = @transform_2, window_bounds = array<i64: 32, 1>}, {pipeline_mode = #tpu.pipeline_mode<synchronous>, transform_indices = @transform_3, window_bounds = array<i64: 32, 32>}, {pipeline_mode = #tpu.pipeline_mode<synchronous>, transform_indices = @transform_4, window_bounds = array<i64: 32, 1>}, {pipeline_mode = #tpu.pipeline_mode<synchronous>, transform_indices = @transform_5, window_bounds = array<i64: 8, 32>}, {pipeline_mode = #tpu.pipeline_mode<synchronous>, transform_indices = @transform_6, window_bounds = array<i64: 8, 1>}, {transform_indices = @transform_7, window_bounds = array<i64: 8, 2>}]} {
    %c0 = arith.constant 0 : index
    %c0_0 = arith.constant 0 : index
    %0 = vector.load %arg1[%c0, %c0_0] : memref<2x16xf32, #tpu.memory_space<vmem>>, vector<2x16xf32>
    %1 = arith.truncf %0 : vector<2x16xf32> to vector<2x16xbf16>
    %c0_1 = arith.constant 0 : index
    %c0_2 = arith.constant 0 : index
    %2 = vector.load %arg2[%c0_1, %c0_2] : memref<32x16xbf16, #tpu.memory_space<vmem>>, vector<32x16xbf16>
    %cst = arith.constant dense<0.000000e+00> : vector<32x2xf32>
    %3 = tpu.matmul %2, %1, %cst {dimension_numbers = #tpu.dot_dimension_numbers<[1], [1], [0], [0], [0, 0, 1, 0], [], []>} : vector<32x16xbf16>, vector<2x16xbf16>, vector<32x2xf32> -> vector<32x2xf32>
    %c0_3 = arith.constant 0 : index
    %c0_4 = arith.constant 0 : index
    %4 = vector.load %arg3[%c0_3, %c0_4] : memref<32x1xf32, #tpu.memory_space<vmem>>, vector<32x1xf32>
    %5 = vector.broadcast %4 : vector<32x1xf32> to vector<32x2xf32>
    %6 = arith.addf %3, %5 : vector<32x2xf32>
    %cst_5 = arith.constant 0.000000e+00 : f32
    %7 = vector.broadcast %cst_5 : f32 to vector<32x2xf32>
    %8 = arith.maximumf %6, %7 : vector<32x2xf32>
    %c0_6 = arith.constant 0 : index
    %c0_7 = arith.constant 0 : index
    %9 = vector.load %arg4[%c0_6, %c0_7] : memref<32x32xbf16, #tpu.memory_space<vmem>>, vector<32x32xbf16>
    %10 = arith.truncf %8 : vector<32x2xf32> to vector<32x2xbf16>
    %cst_8 = arith.constant dense<0.000000e+00> : vector<32x2xf32>
    %11 = tpu.matmul %9, %10, %cst_8 {dimension_numbers = #tpu.dot_dimension_numbers<[1], [0], [0], [1], [0, 0, 1, 1], [], []>} : vector<32x32xbf16>, vector<32x2xbf16>, vector<32x2xf32> -> vector<32x2xf32>
    %c0_9 = arith.constant 0 : index
    %c0_10 = arith.constant 0 : index
    %12 = vector.load %arg5[%c0_9, %c0_10] : memref<32x1xf32, #tpu.memory_space<vmem>>, vector<32x1xf32>
    %13 = vector.broadcast %12 : vector<32x1xf32> to vector<32x2xf32>
    %14 = arith.addf %11, %13 : vector<32x2xf32>
    %cst_11 = arith.constant 0.000000e+00 : f32
    %15 = vector.broadcast %cst_11 : f32 to vector<32x2xf32>
    %16 = arith.maximumf %14, %15 : vector<32x2xf32>
    %c0_12 = arith.constant 0 : index
    %c0_13 = arith.constant 0 : index
    %17 = vector.load %arg6[%c0_12, %c0_13] : memref<8x32xbf16, #tpu.memory_space<vmem>>, vector<8x32xbf16>
    %18 = arith.truncf %16 : vector<32x2xf32> to vector<32x2xbf16>
    %cst_14 = arith.constant dense<0.000000e+00> : vector<8x2xf32>
    %19 = tpu.matmul %17, %18, %cst_14 {dimension_numbers = #tpu.dot_dimension_numbers<[1], [0], [0], [1], [0, 0, 1, 1], [], []>} : vector<8x32xbf16>, vector<32x2xbf16>, vector<8x2xf32> -> vector<8x2xf32>
    %c0_15 = arith.constant 0 : index
    %c0_16 = arith.constant 0 : index
    %20 = vector.load %arg7[%c0_15, %c0_16] : memref<8x1xf32, #tpu.memory_space<vmem>>, vector<8x1xf32>
    %21 = vector.broadcast %20 : vector<8x1xf32> to vector<8x2xf32>
    %22 = arith.addf %19, %21 : vector<8x2xf32>
    %23 = tpu.iota {dimensions = array<i32: 0>} : vector<8x2xi32>
    %c4_i32 = arith.constant 4 : i32
    %24 = vector.broadcast %c4_i32 : i32 to vector<8x2xi32>
    %25 = arith.cmpi sge, %23, %24 : vector<8x2xi32>
    %cst_17 = arith.constant -2.000000e+01 : f32
    %cst_18 = arith.constant 2.000000e+00 : f32
    %26 = vector.broadcast %cst_17 : f32 to vector<8x2xf32>
    %27 = arith.maximumf %26, %22 : vector<8x2xf32>
    %28 = vector.broadcast %cst_18 : f32 to vector<8x2xf32>
    %29 = arith.minimumf %28, %27 : vector<8x2xf32>
    %30 = arith.select %25, %29, %22 : vector<8x2xi1>, vector<8x2xf32>
    %31 = arith.truncf %30 : vector<8x2xf32> to vector<8x2xbf16>
    %c0_19 = arith.constant 0 : index
    %c0_20 = arith.constant 0 : index
    %32 = vector.load %arg8[%c0_19, %c0_20] : memref<8x2xbf16, #tpu.memory_space<vmem>>, vector<8x2xbf16>
    tpu.vector_store %arg8[%c0_19, %c0_20], %31 {strides = array<i32>} : memref<8x2xbf16, #tpu.memory_space<vmem>>, vector<8x2xbf16>,
    return
  }
  func.func @transform_0(%arg0: i32) -> (i32, i32) {
    %c0_i32 = arith.constant 0 : i32
    %c0_i32_0 = arith.constant 0 : i32
    return %arg0, %c0_i32 : i32, i32
  }
  func.func @transform_1(%arg0: i32) -> (i32, i32) {
    %c0_i32 = arith.constant 0 : i32
    %c0_i32_0 = arith.constant 0 : i32
    %c0_i32_1 = arith.constant 0 : i32
    return %c0_i32, %c0_i32_0 : i32, i32
  }
  func.func @transform_2(%arg0: i32) -> (i32, i32) {
    %c0_i32 = arith.constant 0 : i32
    %c0_i32_0 = arith.constant 0 : i32
    %c0_i32_1 = arith.constant 0 : i32
    return %c0_i32, %c0_i32_0 : i32, i32
  }
  func.func @transform_3(%arg0: i32) -> (i32, i32) {
    %c0_i32 = arith.constant 0 : i32
    %c0_i32_0 = arith.constant 0 : i32
    %c0_i32_1 = arith.constant 0 : i32
    return %c0_i32, %c0_i32_0 : i32, i32
  }
  func.func @transform_4(%arg0: i32) -> (i32, i32) {
    %c0_i32 = arith.constant 0 : i32
    %c0_i32_0 = arith.constant 0 : i32
    %c0_i32_1 = arith.constant 0 : i32
    return %c0_i32, %c0_i32_0 : i32, i32
  }
  func.func @transform_5(%arg0: i32) -> (i32, i32) {
    %c0_i32 = arith.constant 0 : i32
    %c0_i32_0 = arith.constant 0 : i32
    %c0_i32_1 = arith.constant 0 : i32
    return %c0_i32, %c0_i32_0 : i32, i32
  }
  func.func @transform_6(%arg0: i32) -> (i32, i32) {
    %c0_i32 = arith.constant 0 : i32
    %c0_i32_0 = arith.constant 0 : i32
    %c0_i32_1 = arith.constant 0 : i32
    return %c0_i32, %c0_i32_0 : i32, i32
  }
  func.func @transform_7(%arg0: i32) -> (i32, i32) {
    %c0_i32 = arith.constant 0 : i32
    %c0_i32_0 = arith.constant 0 : i32
    return %c0_i32, %arg0 : i32, i32
  }
}

</mosaic_0001>

<llo_original>
// kernel: tpu_custom_call.1
$region0: #{tpu_custom_call.1}
  #allocation0 [shape = 'u32[]', space=smem, size = 0x4, offset = 0x4, fixed_abs, tag = 'smem constant byte address 0x4 - core index']
  #allocation1 [shape = 'u32[144,128]{1,0:T(1,128)}', space=vmem, size = 0x12000, scoped, tag = 'internal scratch']
  %s0 = inlined_call_operand.vmem [shape: f32[2,16], index: 0, kind: input, shape index: {}]
  %s1 = inlined_call_operand.vmem [shape: bf16[32,16], index: 1, kind: input, shape index: {}]
  %s2 = inlined_call_operand.vmem [shape: f32[32,1], index: 2, kind: input, shape index: {}]
  %s3 = inlined_call_operand.vmem [shape: bf16[32,32], index: 3, kind: input, shape index: {}]
  %s4 = inlined_call_operand.vmem [shape: f32[32,1], index: 4, kind: input, shape index: {}]
  %s5 = inlined_call_operand.vmem [shape: bf16[8,32], index: 5, kind: input, shape index: {}]
  %s6 = inlined_call_operand.vmem [shape: f32[8,1], index: 6, kind: input, shape index: {}]
  %s7 = inlined_call_operand.vmem [shape: bf16[8,2], index: 7, kind: output, shape index: {}]
  %s8 = sld [smem:[#allocation0]]
  $region38: #{tpu_custom_call.1} parent=0
    _
  %s10 = ssub.s32 1, %s8
  %s11 = scalar_select 0, %s10, %s8
  // Predicated region
  $region2: #{tpu_custom_call.1} parent=0 // pred_check
    _
  $region3: #{tpu_custom_call.1} parent=0 // pred_check_branch
    %13 = sbr.rel (0) target = $region5
  $region4: #{tpu_custom_call.1} parent=0 // pred_region
    _
  $region5: #{tpu_custom_call.1} parent=0 // pred_fallthru
    _
  // Predicated region
  $region6: #{tpu_custom_call.1} parent=0 // pred_check
    _
  $region7: #{tpu_custom_call.1} parent=0 // pred_check_branch
    %15 = sbr.rel (0) target = $region9
  $region8: #{tpu_custom_call.1} parent=0 // pred_region
    _
  $region9: #{tpu_custom_call.1} parent=0 // pred_fallthru
    _
  // Predicated region
  $region10: #{tpu_custom_call.1} parent=0 // pred_check
    _
  $region11: #{tpu_custom_call.1} parent=0 // pred_check_branch
    %17 = sbr.rel (0) target = $region13
  $region12: #{tpu_custom_call.1} parent=0 // pred_region
    _
  $region13: #{tpu_custom_call.1} parent=0 // pred_fallthru
    _
  // Predicated region
  $region14: #{tpu_custom_call.1} parent=0 // pred_check
    _
  $region15: #{tpu_custom_call.1} parent=0 // pred_check_branch
    %19 = sbr.rel (0) target = $region17
  $region16: #{tpu_custom_call.1} parent=0 // pred_region
    _
  $region17: #{tpu_custom_call.1} parent=0 // pred_fallthru
    _
  // Predicated region
  $region18: #{tpu_custom_call.1} parent=0 // pred_check
    _
  $region19: #{tpu_custom_call.1} parent=0 // pred_check_branch
    %21 = sbr.rel (0) target = $region21
  $region20: #{tpu_custom_call.1} parent=0 // pred_region
    _
  $region21: #{tpu_custom_call.1} parent=0 // pred_fallthru
    _
  // Predicated region
  $region22: #{tpu_custom_call.1} parent=0 // pred_check
    _
  $region23: #{tpu_custom_call.1} parent=0 // pred_check_branch
    %23 = sbr.rel (0) target = $region25
  $region24: #{tpu_custom_call.1} parent=0 // pred_region
    _
  $region25: #{tpu_custom_call.1} parent=0 // pred_fallthru
    _
  // Predicated region
  $region26: #{tpu_custom_call.1} parent=0 // pred_check
    _
  $region27: #{tpu_custom_call.1} parent=0 // pred_check_branch
    %25 = sbr.rel (0) target = $region29
  $region28: #{tpu_custom_call.1} parent=0 // pred_region
    _
  $region29: #{tpu_custom_call.1} parent=0 // pred_fallthru
    _
  %v27 = vld [vmem:[%s0] sm:$0x3]
  %v28 = vpack.c.bf16 %v27, %v27
  %v29 = vld [vmem:[%s1] sm:$0xf]
  %v30 = vld [vmem:[%s1 + $0x4] sm:$0xf]
  %v31 = vld [vmem:[%s1 + $0x8] sm:$0xf]
  %v32 = vld [vmem:[%s1 + $0xc] sm:$0xf]
  %v33 = vld [vmem:[%s2] sm:$0xff]
  %v34 = vld [vmem:[%s2 + $0x8] sm:$0xff]
  %v35 = vld [vmem:[%s2 + $0x10] sm:$0xff]
  %v36 = vld [vmem:[%s2 + $0x18] sm:$0xff]
  %38 = vset.pattern.permute.xlu0 0
  %39 = vperm.xlu0 %38, %v33
  %v40 = vpop.permute.xlu0 %39
  %43 = vset.pattern.permute.xlu0 0
  %44 = vperm.xlu0 %43, %v34
  %v45 = vpop.permute.xlu0 %44
  %48 = vset.pattern.permute.xlu0 0
  %49 = vperm.xlu0 %48, %v35
  %v50 = vpop.permute.xlu0 %49
  %53 = vset.pattern.permute.xlu0 0
  %54 = vperm.xlu0 %53, %v36
  %v55 = vpop.permute.xlu0 %54
  %v61 = vunpack.c.l.b16 %v29
  %v62 = vunpack.c.l.b16 %v30
  %v63 = vunpack.c.l.b16 %v31
  %v64 = vunpack.c.l.b16 %v32
  %v65 = vpack.c.b16 %v62, %v61
  %v66 = vpack.c.b16 %v64, %v63
  %vm67 = vcmask 130048
  %v69 = vsel %vm67, %v65, 0
  %v72 = vsel %vm67, %v66, 0
  %v75 = vsel %vm67, %v28, 0
  %77 = vmatprep.subr.bf16.mxu0 0
  %78 = vmatpush1.bf16.xpose.msra.mxu0 0
  %79 = vmatprep.subr.bf16.mxu0 0
  %80 = vmatpush1.bf16.xpose.msra.mxu0 0
  %81 = vmatprep.subr.bf16.mxu0 0
  %82 = vmatpush1.bf16.xpose.msra.mxu0 0
  %83 = vmatprep.subr.bf16.mxu0 0
  %84 = vmatpush1.bf16.xpose.msra.mxu0 0
  %85 = vmatprep.subr.bf16.mxu0 0
  %86 = vmatpush1.bf16.xpose.msra.mxu0 0
  %87 = vmatprep.subr.bf16.mxu0 0
  %88 = vmatpush1.bf16.xpose.msra.mxu0 0
  %89 = vmatprep.subr.bf16.mxu0 0
  %90 = vmatpush1.bf16.xpose.msra.mxu0 0
  %91 = vmatprep.subr.bf16.mxu0 0
  %92 = vmatpush1.bf16.xpose.msra.mxu0 %v75
  %93 = vmatprep.subr.bf16.mxu0 0
  %94 = vmatpush2.bf16.xpose.msra.mxu0 0
  %95 = vmatprep.subr.bf16.mxu0 0
  %96 = vmatpush2.bf16.xpose.msra.mxu0 0
  %97 = vmatprep.subr.bf16.mxu0 0
  %98 = vmatpush2.bf16.xpose.msra.mxu0 0
  %99 = vmatprep.subr.bf16.mxu0 0
  %100 = vmatpush2.bf16.xpose.msra.mxu0 0
  %101 = vmatprep.subr.bf16.mxu0 0
  %102 = vmatpush2.bf16.xpose.msra.mxu0 0
  %103 = vmatprep.subr.bf16.mxu0 0
  %104 = vmatpush2.bf16.xpose.msra.mxu0 0
  %105 = vmatprep.subr.bf16.mxu0 0
  %106 = vmatpush2.bf16.xpose.msra.mxu0 0
  %107 = vmatprep.subr.bf16.mxu0 0
  %108 = vmatpush2.bf16.xpose.msra.mxu0 0
  %109 = vmatprep.mubr.bf16.mxu0 0
  %110 = vmatmul.mubr.bf16.gmra.mxu0 %v69
  %v111 = vpop.f32.mrf.mxu0
  %v112 = vadd.f32 %v40, %v111
  %v113 = vpop.f32.mrf.mxu0
  %v114 = vpop.f32.mrf.mxu0
  %v115 = vadd.f32 %v45, %v114
  %v116 = vpop.f32.mrf.mxu0
  %117 = vmatprep.mubr.bf16.mxu0 0
  %118 = vmatmul.mubr.bf16.gmra.mxu0 %v72
  %v119 = vpop.f32.mrf.mxu0
  %v120 = vadd.f32 %v50, %v119
  %v121 = vpop.f32.mrf.mxu0
  %v122 = vpop.f32.mrf.mxu0
  %v123 = vadd.f32 %v55, %v122
  %v124 = vpop.f32.mrf.mxu0
  %125 = vdwg.mxu0
  %v126 = vmax.f32 %v112, 0.0
  %v127 = vmax.f32 %v115, 0.0
  %v128 = vmax.f32 %v120, 0.0
  %v129 = vmax.f32 %v123, 0.0
  %v130 = vld [vmem:[%s3] sm:$0xf]
  %v131 = vld [vmem:[%s3 + $0x4] sm:$0xf]
  %v132 = vld [vmem:[%s3 + $0x8] sm:$0xf]
  %v133 = vld [vmem:[%s3 + $0xc] sm:$0xf]
  %v134 = vpack.c.bf16 %v127, %v126
  %v135 = vpack.c.bf16 %v129, %v128
  %v136 = vld [vmem:[%s4] sm:$0xff]
  %v137 = vld [vmem:[%s4 + $0x8] sm:$0xff]
  %v138 = vld [vmem:[%s4 + $0x10] sm:$0xff]
  %v139 = vld [vmem:[%s4 + $0x18] sm:$0xff]
  %141 = vset.pattern.permute.xlu0 0
  %142 = vperm.xlu0 %141, %v136
  %v143 = vpop.permute.xlu0 %142
  %146 = vset.pattern.permute.xlu0 0
  %147 = vperm.xlu0 %146, %v137
  %v148 = vpop.permute.xlu0 %147
  %151 = vset.pattern.permute.xlu0 0
  %152 = vperm.xlu0 %151, %v138
  %v153 = vpop.permute.xlu0 %152
  %156 = vset.pattern.permute.xlu0 0
  %157 = vperm.xlu0 %156, %v139
  %v158 = vpop.permute.xlu0 %157
  %v164 = vunpack.c.l.b16 %v130
  %v165 = vunpack.c.l.b16 %v131
  %v166 = vunpack.c.l.b16 %v132
  %v167 = vunpack.c.l.b16 %v133
  %v168 = vpack.c.b16 %v165, %v164
  %v169 = vpack.c.b16 %v167, %v166
  %vm170 = vcmask 261120
  %v172 = vsel %vm170, %v168, 0
  %v175 = vsel %vm170, %v169, 0
  %177 = vmatprep.subr.bf16.mxu0 0
  %178 = vmatpush1.bf16.msra.mxu0 0
  %179 = vmatprep.subr.bf16.mxu0 0
  %180 = vmatpush1.bf16.msra.mxu0 0
  %181 = vmatprep.subr.bf16.mxu0 0
  %182 = vmatpush1.bf16.msra.mxu0 0
  %183 = vmatprep.subr.bf16.mxu0 0
  %184 = vmatpush1.bf16.msra.mxu0 0
  %185 = vmatprep.subr.bf16.mxu0 0
  %186 = vmatpush1.bf16.msra.mxu0 0
  %187 = vmatprep.subr.bf16.mxu0 0
  %188 = vmatpush1.bf16.msra.mxu0 0
  %189 = vmatprep.subr.bf16.mxu0 0
  %190 = vmatpush1.bf16.msra.mxu0 %v135
  %191 = vmatprep.subr.bf16.mxu0 0
  %192 = vmatpush1.bf16.msra.mxu0 %v134
  %193 = vmatprep.subr.bf16.mxu0 0
  %194 = vmatpush2.bf16.msra.mxu0 0
  %195 = vmatprep.subr.bf16.mxu0 0
  %196 = vmatpush2.bf16.msra.mxu0 0
  %197 = vmatprep.subr.bf16.mxu0 0
  %198 = vmatpush2.bf16.msra.mxu0 0
  %199 = vmatprep.subr.bf16.mxu0 0
  %200 = vmatpush2.bf16.msra.mxu0 0
  %201 = vmatprep.subr.bf16.mxu0 0
  %202 = vmatpush2.bf16.msra.mxu0 0
  %203 = vmatprep.subr.bf16.mxu0 0
  %204 = vmatpush2.bf16.msra.mxu0 0
  %205 = vmatprep.subr.bf16.mxu0 0
  %206 = vmatpush2.bf16.msra.mxu0 0
  %207 = vmatprep.subr.bf16.mxu0 0
  %208 = vmatpush2.bf16.msra.mxu0 0
  %209 = vmatprep.mubr.bf16.mxu0 0
  %210 = vmatmul.mubr.bf16.gmra.mxu0 %v172
  %v211 = vpop.f32.mrf.mxu0
  %v212 = vadd.f32 %v143, %v211
  %v213 = vpop.f32.mrf.mxu0
  %v214 = vpop.f32.mrf.mxu0
  %v215 = vadd.f32 %v148, %v214
  %v216 = vpop.f32.mrf.mxu0
  %217 = vmatprep.mubr.bf16.mxu0 0
  %218 = vmatmul.mubr.bf16.gmra.mxu0 %v175
  %v219 = vpop.f32.mrf.mxu0
  %v220 = vadd.f32 %v153, %v219
  %v221 = vpop.f32.mrf.mxu0
  %v222 = vpop.f32.mrf.mxu0
  %v223 = vadd.f32 %v158, %v222
  %v224 = vpop.f32.mrf.mxu0
  %225 = vdwg.mxu0
  %v226 = vmax.f32 %v212, 0.0
  %v227 = vmax.f32 %v215, 0.0
  %v228 = vmax.f32 %v220, 0.0
  %v229 = vmax.f32 %v223, 0.0
  %v230 = vld [vmem:[%s5] sm:$0xf]
  %v231 = vpack.c.bf16 %v227, %v226
  %v232 = vpack.c.bf16 %v229, %v228
  %v233 = vld [vmem:[%s6] sm:$0xff]
  %235 = vset.pattern.permute.xlu0 0
  %236 = vperm.xlu0 %235, %v233
  %v237 = vpop.permute.xlu0 %236
  %v240 = vsel %vm170, %v230, 0
  %242 = vmatprep.subr.bf16.mxu0 0
  %243 = vmatpush1.bf16.msra.mxu0 0
  %244 = vmatprep.subr.bf16.mxu0 0
  %245 = vmatpush1.bf16.msra.mxu0 0
  %246 = vmatprep.subr.bf16.mxu0 0
  %247 = vmatpush1.bf16.msra.mxu0 0
  %248 = vmatprep.subr.bf16.mxu0 0
  %249 = vmatpush1.bf16.msra.mxu0 0
  %250 = vmatprep.subr.bf16.mxu0 0
  %251 = vmatpush1.bf16.msra.mxu0 0
  %252 = vmatprep.subr.bf16.mxu0 0
  %253 = vmatpush1.bf16.msra.mxu0 0
  %254 = vmatprep.subr.bf16.mxu0 0
  %255 = vmatpush1.bf16.msra.mxu0 %v232
  %256 = vmatprep.subr.bf16.mxu0 0
  %257 = vmatpush1.bf16.msra.mxu0 %v231
  %258 = vmatprep.subr.bf16.mxu0 0
  %259 = vmatpush2.bf16.msra.mxu0 0
  %260 = vmatprep.subr.bf16.mxu0 0
  %261 = vmatpush2.bf16.msra.mxu0 0
  %262 = vmatprep.subr.bf16.mxu0 0
  %263 = vmatpush2.bf16.msra.mxu0 0
  %264 = vmatprep.subr.bf16.mxu0 0
  %265 = vmatpush2.bf16.msra.mxu0 0
  %266 = vmatprep.subr.bf16.mxu0 0
  %267 = vmatpush2.bf16.msra.mxu0 0
  %268 = vmatprep.subr.bf16.mxu0 0
  %269 = vmatpush2.bf16.msra.mxu0 0
  %270 = vmatprep.subr.bf16.mxu0 0
  %271 = vmatpush2.bf16.msra.mxu0 0
  %272 = vmatprep.subr.bf16.mxu0 0
  %273 = vmatpush2.bf16.msra.mxu0 0
  %274 = vmatprep.mubr.bf16.mxu0 0
  %275 = vmatmul.mubr.bf16.gmra.mxu0 %v240
  %v276 = vpop.f32.mrf.mxu0
  %v277 = vadd.f32 %v237, %v276
  %v278 = vpop.f32.mrf.mxu0
  %v279 = vpop.f32.mrf.mxu0
  %v280 = vpop.f32.mrf.mxu0
  %281 = vdwg.mxu0
  %v282 = vlaneseq
  %v283 = vshrl.u32 %v282, 7
  %vm284 = vcmp.ge.s32.totalorder %v283, 4
  %v285 = vmax.f32 %v277, -20.0
  %v286 = vmin.f32 %v285, 2.0
  %v287 = vsel %vm284, %v286, %v277
  %v288 = vpack.c.bf16 %v287, %v287
  %vm289 = vcmask 11264
  %290 = vst.msk [vmem:[%s7] sm:$0xf] %vm289, %v288
  // Predicated region
  $region30: #{tpu_custom_call.1} parent=0 // pred_check
    _
  $region31: #{tpu_custom_call.1} parent=0 // pred_check_branch
    %292 = sbr.rel (0) target = $region33
  $region32: #{tpu_custom_call.1} parent=0 // pred_region
    _
  $region33: #{tpu_custom_call.1} parent=0 // pred_fallthru
    _
  // Predicated region
  $region34: #{tpu_custom_call.1} parent=0 // pred_check
    _
  $region35: #{tpu_custom_call.1} parent=0 // pred_check_branch
    %294 = sbr.rel (0) target = $region37
  $region36: #{tpu_custom_call.1} parent=0 // pred_region
    _
  $region37: #{tpu_custom_call.1} parent=0 // pred_fallthru
    _

</llo_original>
